<compile_context>
chip_gen: v6e
topology: v6e:2x2x1
jax: 0.10.0
libtpu: 0.0.40
codegen_flags: <defaults>
</compile_context>

<pallas_src>
import math

import jax
import jax.numpy as jnp
from jax.experimental import pallas as pl
from jax.experimental.pallas import tpu as pltpu

_LANE = 128
_MAX_TILE_BYTES = 4 * 1024 * 1024      # per-operand VMEM tile budget
_VMEM_LIMIT_BYTES = 32 * 1024 * 1024   # 3 ops x 2 bufs x 4 MiB = 24 MiB + headroom
_MIN_PALLAS_BYTES = 2 * 1024 * 1024    # below this, launch overhead dominates


def _add_kernel(a_ref, b_ref, o_ref):
    # Pure elementwise add on a lane-dense (block_rows, lanes) VMEM tile.
    o_ref[...] = a_ref[...] + b_ref[...]


def _round_up(x, m):
    return ((x + m - 1) // m) * m


def _sublane_multiple(dtype):
    # Sub-32-bit dtypes pack along sublanes: native packed tile needs more rows.
    itemsize = jnp.dtype(dtype).itemsize
    if itemsize >= 4:
        return 8
    if itemsize == 2:
        return 16
    return 32


def _pick_lanes(total, sub):
    """Largest lane width (multiple of 128) dividing `total`; else pad to 128."""
    for cand in (2048, 1024, 512, 256, 128):
        if total % cand == 0 and total // cand >= sub:
            return cand, False
    for cand in (2048, 1024, 512, 256, 128):
        if total % cand == 0:
            return cand, False
    # Misaligned total: minimum lane width, pad (< 128 extra elements).
    return _LANE, True


def _pick_block_rows(rows, lanes, itemsize, sub):
    """dtype-aware row tile, <= ~4 MiB/operand, >= 2 grid steps when possible."""
    if rows <= sub:
        return rows  # full extent is always a legal block dim
    bytes_per_row = max(1, lanes * itemsize)
    max_rows = max(sub, (_MAX_TILE_BYTES // bytes_per_row) // sub * sub)
    block_rows = min(_round_up(rows, sub), max_rows)
    # Guarantee >= 2 steps so the "parallel" axis can split across v7x's 2 TCs.
    if pl.cdiv(rows, block_rows) < 2:
        block_rows = max(sub, _round_up(pl.cdiv(rows, 2), sub))
    return block_rows


def fusion_s_add(a, b, *, min_pallas_bytes=_MIN_PALLAS_BYTES):
    """Elementwise a + b via a Pallas TPU kernel (same shape/dtype required)."""
    # TODO(synk): torch '+' broadcasting / dtype promotion is not implemented;
    # shapes and dtypes must match (as in the module's intended fusion use).
    assert a.shape == b.shape, (a.shape, b.shape)
    assert a.dtype == b.dtype, (a.dtype, b.dtype)

    orig_shape = a.shape
    dtype = a.dtype
    total = math.prod(orig_shape) if orig_shape else 1
    itemsize = jnp.dtype(dtype).itemsize

    # Tiny (or empty) inputs: custom-call launch dominates; let XLA fuse it.
    if total == 0 or total * itemsize < min_pallas_bytes:
        return a + b

    sub = _sublane_multiple(dtype)
    lanes, needs_pad = _pick_lanes(total, sub)

    a1 = a.reshape(total)
    b1 = b.reshape(total)
    if needs_pad:
        padded = _round_up(total, lanes)
        a1 = jnp.pad(a1, (0, padded - total))
        b1 = jnp.pad(b1, (0, padded - total))
    else:
        padded = total

    rows = padded // lanes
    a2 = a1.reshape(rows, lanes)
    b2 = b1.reshape(rows, lanes)

    block_rows = _pick_block_rows(rows, lanes, itemsize, sub)
    grid = (pl.cdiv(rows, block_rows),)
    spec = pl.BlockSpec((block_rows, lanes), lambda i: (i, 0))

    out2 = pl.pallas_call(
        _add_kernel,
        out_shape=jax.ShapeDtypeStruct((rows, lanes), dtype),
        grid=grid,
        in_specs=[spec, spec],
        out_specs=spec,
        compiler_params=pltpu.CompilerParams(
            dimension_semantics=("parallel",),
            vmem_limit_bytes=_VMEM_LIMIT_BYTES,
        ),
    )(a2, b2)

    out1 = out2.reshape(padded)
    if needs_pad:
        out1 = out1[:total]
    return out1.reshape(orig_shape)


def fusion_s(x, **kwargs):
    """Mirror of FusionS.forward: takes a sequence, returns x[0] + x[1]."""
    return fusion_s_add(x[0], x[1], **kwargs)


if __name__ == "__main__":
    key = jax.random.PRNGKey(0)
    k0, k1, k2, k3 = jax.random.split(key, 4)

    # 1) Small NCHW feature maps (the module's fusion-of-two-branches use).
    #    Force the Pallas path (default heuristic would bypass for 8 KiB inputs).
    x0 = jax.random.normal(k0, (2, 4, 16, 16), dtype=jnp.float32)
    x1 = jax.random.normal(k1, (2, 4, 16, 16), dtype=jnp.float32)
    out = jax.block_until_ready(fusion_s([x0, x1], min_pallas_bytes=0))
    ref = x0 + x1
    assert out.shape == ref.shape and out.dtype == ref.dtype
    assert jnp.allclose(out, ref), "mismatch vs x0 + x1 (aligned f32 path)"

    # 2) Misaligned total (not a multiple of 128): exercises pad + masked tail.
    y0 = jax.random.normal(k2, (3, 5, 17, 13), dtype=jnp.float32)
    y1 = jax.random.normal(k3, (3, 5, 17, 13), dtype=jnp.float32)
    out_y = jax.block_until_ready(fusion_s([y0, y1], min_pallas_bytes=0))
    assert jnp.allclose(out_y, y0 + y1), "mismatch (padded/misaligned path)"

    # 3) bf16: exercises the dtype-aware (16-row) sublane tile.
    z0 = x0.astype(jnp.bfloat16)
    z1 = x1.astype(jnp.bfloat16)
    out_z = jax.block_until_ready(fusion_s([z0, z1], min_pallas_bytes=0))
    assert out_z.dtype == jnp.bfloat16
    assert jnp.allclose(out_z.astype(jnp.float32), (z0 + z1).astype(jnp.float32))

    # 4) Default heuristic path (tiny input -> plain XLA add).
    out_d = jax.block_until_ready(fusion_s([x0, x1]))
    assert jnp.allclose(out_d, ref)

    print("KERNEL_OK")
</pallas_src>

<mosaic_0001>
module attributes {stable_mosaic.version = 11 : i64} {
  func.func @_add_kernel(%arg0: i32, %arg1: memref<8x256xf32, #tpu.memory_space<vmem>>, %arg2: memref<8x256xf32, #tpu.memory_space<vmem>>, %arg3: memref<8x256xf32, #tpu.memory_space<vmem>>) attributes {dimension_semantics = [#tpu.dimension_semantics<parallel>], iteration_bounds = array<i64: 1>, scalar_prefetch = 0 : i64, scratch_operands = 0 : i64, tpu.core_type = #tpu.core_type<tc>, window_params = [{transform_indices = @transform_0, window_bounds = array<i64: 8, 256>}, {transform_indices = @transform_1, window_bounds = array<i64: 8, 256>}, {transform_indices = @transform_2, window_bounds = array<i64: 8, 256>}]} {
    %c0 = arith.constant 0 : index
    %c0_0 = arith.constant 0 : index
    %0 = vector.load %arg1[%c0, %c0_0] : memref<8x256xf32, #tpu.memory_space<vmem>>, vector<8x256xf32>
    %c0_1 = arith.constant 0 : index
    %c0_2 = arith.constant 0 : index
    %1 = vector.load %arg2[%c0_1, %c0_2] : memref<8x256xf32, #tpu.memory_space<vmem>>, vector<8x256xf32>
    %2 = arith.addf %0, %1 : vector<8x256xf32>
    %c0_3 = arith.constant 0 : index
    %c0_4 = arith.constant 0 : index
    %3 = vector.load %arg3[%c0_3, %c0_4] : memref<8x256xf32, #tpu.memory_space<vmem>>, vector<8x256xf32>
    tpu.vector_store %arg3[%c0_3, %c0_4], %2 {strides = array<i32>} : memref<8x256xf32, #tpu.memory_space<vmem>>, vector<8x256xf32>,
    return
  }
  func.func @transform_0(%arg0: i32) -> (i32, i32) {
    %c0_i32 = arith.constant 0 : i32
    %c0_i32_0 = arith.constant 0 : i32
    return %arg0, %c0_i32 : i32, i32
  }
  func.func @transform_1(%arg0: i32) -> (i32, i32) {
    %c0_i32 = arith.constant 0 : i32
    %c0_i32_0 = arith.constant 0 : i32
    return %arg0, %c0_i32 : i32, i32
  }
  func.func @transform_2(%arg0: i32) -> (i32, i32) {
    %c0_i32 = arith.constant 0 : i32
    %c0_i32_0 = arith.constant 0 : i32
    return %arg0, %c0_i32 : i32, i32
  }
}

</mosaic_0001>

<llo_original>
// kernel: tpu_custom_call.1
$region0: #{tpu_custom_call.1}
  #allocation0 [shape = 'u32[]', space=smem, size = 0x4, offset = 0x4, fixed_abs, tag = 'smem constant byte address 0x4 - core index']
  #allocation1 [shape = 'u32[144,128]{1,0:T(1,128)}', space=vmem, size = 0x12000, scoped, tag = 'internal scratch']
  %s0 = inlined_call_operand.hbm [shape: f32[8,256], index: 0, kind: input, shape index: {}]
  %s1 = inlined_call_operand.hbm [shape: f32[8,256], index: 1, kind: input, shape index: {}]
  %s2 = inlined_call_operand.hbm [shape: f32[8,256], index: 2, kind: output, shape index: {}]
  %s3 = sld [smem:[#allocation0]]
  $region26: #{tpu_custom_call.1} parent=0
    _
  %s5 = ssub.s32 1, %s3
  %s6 = scalar_select 0, %s5, %s3
  $region1: #{tpu_custom_call.1} parent=0
    #allocation2 [shape = 'u8[8192]{0}', space=vmem, size = 0x2000, scoped, tag = 'input window, operand 0, single buffered']
    #allocation3 [shape = 's32[1]{0}', space=sflag, size = 0x4, scoped, tag = 'scoped memory for tpu_custom_call.1']
    #allocation4 [shape = 's32[1]{0}', space=sflag, size = 0x4, scoped, tag = 'scoped memory for tpu_custom_call.1']
    #allocation5 [shape = 'u8[8192]{0}', space=vmem, size = 0x2000, scoped, tag = 'input window, operand 1, single buffered']
    #allocation6 [shape = 's32[1]{0}', space=sflag, size = 0x4, scoped, tag = 'scoped memory for tpu_custom_call.1']
    #allocation7 [shape = 'u8[8192]{0}', space=vmem, size = 0x2000, scoped, tag = 'output window, operand 0, single buffered']
    %7 = vsyncpa [#allocation3], 0
    %8 = vsyncpa [#allocation6], 0
    %9 = vsyncpa [#allocation4], 0
    // Predicated region
    $region2: #{tpu_custom_call.1} parent=1 // pred_check
      _
    $region3: #{tpu_custom_call.1} parent=1 // pred_check_branch
      %11 = sbr.rel (0) target = $region5
    $region4: #{tpu_custom_call.1} parent=1 // pred_region
      %s13 = ssub.s32 256, 256
      %14 = vsyncadd [#allocation3], %s13
      %s16 = sshll.u32 [#allocation2], 4
      %s17 = int_to_ptr.vmem [resolvable:$true] %s16
      %19 = dma.hbm_to_vmem [thread:$0]  %s0, 256, %s17, [#allocation3]
    $region5: #{tpu_custom_call.1} parent=1 // pred_fallthru
      _
    // Predicated region
    $region6: #{tpu_custom_call.1} parent=1 // pred_check
      _
    $region7: #{tpu_custom_call.1} parent=1 // pred_check_branch
      %21 = sbr.rel (0) target = $region9
    $region8: #{tpu_custom_call.1} parent=1 // pred_region
      %s23 = ssub.s32 256, 256
      %24 = vsyncadd [#allocation6], %s23
      %s26 = sshll.u32 [#allocation5], 4
      %s27 = int_to_ptr.vmem [resolvable:$true] %s26
      %29 = dma.hbm_to_vmem [thread:$0]  %s1, 256, %s27, [#allocation6]
    $region9: #{tpu_custom_call.1} parent=1 // pred_fallthru
      _
    // Predicated region
    $region10: #{tpu_custom_call.1} parent=1 // pred_check
      _
    $region11: #{tpu_custom_call.1} parent=1 // pred_check_branch
      %31 = sbr.rel (0) target = $region13
    $region12: #{tpu_custom_call.1} parent=1 // pred_region
      %32 = dma.done [#allocation3], 256
    $region13: #{tpu_custom_call.1} parent=1 // pred_fallthru
      _
    // Predicated region
    $region14: #{tpu_custom_call.1} parent=1 // pred_check
      _
    $region15: #{tpu_custom_call.1} parent=1 // pred_check_branch
      %34 = sbr.rel (0) target = $region17
    $region16: #{tpu_custom_call.1} parent=1 // pred_region
      %35 = dma.done [#allocation6], 256
    $region17: #{tpu_custom_call.1} parent=1 // pred_fallthru
      _
    %v36 = vld [vmem:[#allocation2] sm:$0xff]
    %v37 = vld [vmem:[#allocation2 + $0x8] sm:$0xff]
    %v38 = vld [vmem:[#allocation5] sm:$0xff]
    %v39 = vld [vmem:[#allocation5 + $0x8] sm:$0xff]
    %v40 = vadd.f32 %v36, %v38
    %v41 = vadd.f32 %v37, %v39
    %42 = vst [vmem:[#allocation7] sm:$0xff] %v40
    %43 = vst [vmem:[#allocation7 + $0x8] sm:$0xff] %v41
    // Predicated region
    $region18: #{tpu_custom_call.1} parent=1 // pred_check
      _
    $region19: #{tpu_custom_call.1} parent=1 // pred_check_branch
      %45 = sbr.rel (0) target = $region21
    $region20: #{tpu_custom_call.1} parent=1 // pred_region
      %s47 = ssub.s32 256, 256
      %48 = vsyncadd [#allocation4], %s47
      %s50 = sshll.u32 [#allocation7], 4
      %s51 = int_to_ptr.vmem [resolvable:$true] %s50
      %53 = dma.vmem_to_hbm [thread:$0]  %s51, 256, %s2, [#allocation4]
    $region21: #{tpu_custom_call.1} parent=1 // pred_fallthru
      _
    // Predicated region
    $region22: #{tpu_custom_call.1} parent=1 // pred_check
      _
    $region23: #{tpu_custom_call.1} parent=1 // pred_check_branch
      %55 = sbr.rel (0) target = $region25
    $region24: #{tpu_custom_call.1} parent=1 // pred_region
      %56 = dma.done [#allocation4], 256
    $region25: #{tpu_custom_call.1} parent=1 // pred_fallthru
      _
    %57 = vsyncpa [#allocation3], 1
    %58 = vsyncpa [#allocation6], 1
    %59 = vsyncpa [#allocation4], 1

</llo_original>
